<compile_context>
chip_gen: v7x
topology: tpu7x:2x2x1
jax: 0.10.0
libtpu: 0.0.40
codegen_flags: <defaults>
</compile_context>

<pallas_src>
import jax
import jax.numpy as jnp
from jax.experimental import pallas as pl
from jax.experimental.pallas import tpu as pltpu

INPUT_SIZE = 32
HIDDEN_SIZES = [128, 64, 32, 16]
OUTPUT_SIZE = 1
BN_EPS = 1e-5
BATCH = 8

PAD = 128          # lane-dense width for all activations / weights
NLAYERS = 5        # 4 hidden blocks + output layer
MAX_TB = 512       # batch tile cap (keeps tiles tiny even on v7x's 64 MiB VMEM)


# --------------------------------------------------------------------------
# Kernel: whole 5-layer MLP on one (TB, 128) batch tile.
# --------------------------------------------------------------------------
def _dnn_adult_kernel(x_ref, w_ref, c_ref, o_ref):
    h = x_ref[...]                                            # (TB, 128) f32
    # 4 x [Linear(+folded BN) -> ReLU]   (Dropout = identity in eval mode)
    for li in range(NLAYERS - 1):
        z = jnp.dot(h, w_ref[li], preferred_element_type=jnp.float32)
        z = z + c_ref[li]                                     # (1,128) broadcast
        h = jnp.maximum(z, 0.0)
    # Output Linear -> Sigmoid (padded lanes give sigmoid(0)=0.5, sliced away)
    logit = jnp.dot(h, w_ref[NLAYERS - 1],
                    preferred_element_type=jnp.float32) + c_ref[NLAYERS - 1]
    o_ref[...] = jax.nn.sigmoid(logit)


# --------------------------------------------------------------------------
# Wrapper: pad to lane-dense layout, run the batch grid, slice real outputs.
# --------------------------------------------------------------------------
@jax.jit
def dnn_adult_forward(x, w_all, c_all):
    b = x.shape[0]
    tb = min(((b + 7) // 8) * 8, MAX_TB)          # batch tile (multiple of 8)
    nb = -(-b // tb)                              # cdiv
    b_pad = nb * tb

    # Zero-pad batch rows and feature lanes (padded lanes stay inert because
    # the packed weights are zero there).
    x_p = jnp.zeros((b_pad, PAD), jnp.float32).at[:b, :INPUT_SIZE].set(x)

    out = pl.pallas_call(
        _dnn_adult_kernel,
        out_shape=jax.ShapeDtypeStruct((b_pad, PAD), jnp.float32),
        grid=(nb,),
        in_specs=[
            pl.BlockSpec((tb, PAD), lambda i: (i, 0)),              # x tile
            pl.BlockSpec((NLAYERS, PAD, PAD), lambda i: (0, 0, 0)),  # weights
            pl.BlockSpec((NLAYERS, 1, PAD), lambda i: (0, 0, 0)),    # biases
        ],
        out_specs=pl.BlockSpec((tb, PAD), lambda i: (i, 0)),
        compiler_params=pltpu.CompilerParams(
            dimension_semantics=("parallel",)),   # shards batch across TCs (v7x)
    )(x_p, w_all, c_all)

    return out[:b, :OUTPUT_SIZE]


# --------------------------------------------------------------------------
# Parameter construction (PyTorch-compatible shapes) + BN folding + packing.
# --------------------------------------------------------------------------
def make_raw_params(key):
    """Synthetic PyTorch-style params: per layer (W, b[, gamma, beta, mean, var])."""
    sizes = [INPUT_SIZE] + HIDDEN_SIZES + [OUTPUT_SIZE]
    keys = jax.random.split(key, 32)
    ki = iter(keys)
    raw = []
    for li in range(NLAYERS):
        fan_in, fan_out = sizes[li], sizes[li + 1]
        bound = 1.0 / float(fan_in) ** 0.5
        w = jax.random.uniform(next(ki), (fan_in, fan_out), jnp.float32, -bound, bound)
        b = jax.random.uniform(next(ki), (fan_out,), jnp.float32, -bound, bound)
        if li < NLAYERS - 1:
            gamma = 1.0 + 0.1 * jax.random.normal(next(ki), (fan_out,), jnp.float32)
            beta = 0.1 * jax.random.normal(next(ki), (fan_out,), jnp.float32)
            mean = 0.05 * jax.random.normal(next(ki), (fan_out,), jnp.float32)
            var = jnp.abs(1.0 + 0.1 * jax.random.normal(next(ki), (fan_out,), jnp.float32))
            raw.append((w, b, gamma, beta, mean, var))
        else:
            raw.append((w, b))
    return raw


def fold_and_pack(raw):
    """Fold eval-mode BN + bias into weights and pack into lane-dense tensors."""
    sizes = [INPUT_SIZE] + HIDDEN_SIZES + [OUTPUT_SIZE]
    w_all = jnp.zeros((NLAYERS, PAD, PAD), jnp.float32)
    c_all = jnp.zeros((NLAYERS, 1, PAD), jnp.float32)
    for li in range(NLAYERS):
        fan_in, fan_out = sizes[li], sizes[li + 1]
        if li < NLAYERS - 1:
            w, b, gamma, beta, mean, var = raw[li]
            scale = gamma / jnp.sqrt(var + BN_EPS)
            shift = beta - mean * scale
            w_eff = w * scale[None, :]
            c_eff = b * scale + shift
        else:
            w, b = raw[li]
            w_eff, c_eff = w, b
        w_all = w_all.at[li, :fan_in, :fan_out].set(w_eff)
        c_all = c_all.at[li, 0, :fan_out].set(c_eff)
    return w_all, c_all


# --------------------------------------------------------------------------
# Pure-JAX reference matching the original (unfolded) PyTorch eval forward.
# --------------------------------------------------------------------------
def reference_forward(x, raw):
    h = x
    for li in range(NLAYERS - 1):
        w, b, gamma, beta, mean, var = raw[li]
        h = h @ w + b
        h = (h - mean) / jnp.sqrt(var + BN_EPS) * gamma + beta   # BN (eval)
        h = jnp.maximum(h, 0.0)                                  # ReLU (dropout=id)
    w, b = raw[NLAYERS - 1]
    return jax.nn.sigmoid(h @ w + b)


if __name__ == "__main__":
    key = jax.random.PRNGKey(0)
    kx, kp = jax.random.split(key)
    x = jax.random.normal(kx, (BATCH, INPUT_SIZE), jnp.float32)

    raw = make_raw_params(kp)
    w_all, c_all = fold_and_pack(raw)

    out = dnn_adult_forward(x, w_all, c_all)
    out = jax.block_until_ready(out)

    ref = reference_forward(x, raw)
    assert out.shape == (BATCH, OUTPUT_SIZE)
    assert jnp.allclose(out, ref, atol=1e-4, rtol=1e-4)
    print("KERNEL_OK")
</pallas_src>

<mosaic_0001>
module attributes {stable_mosaic.version = 11 : i64} {
  func.func @_dnn_adult_kernel(%arg0: i32, %arg1: memref<8x128xf32, #tpu.memory_space<vmem>>, %arg2: memref<5x128x128xf32, #tpu.memory_space<vmem>>, %arg3: memref<5x1x128xf32, #tpu.memory_space<vmem>>, %arg4: memref<8x128xf32, #tpu.memory_space<vmem>>) attributes {dimension_semantics = [#tpu.dimension_semantics<parallel>], iteration_bounds = array<i64: 1>, scalar_prefetch = 0 : i64, scratch_operands = 0 : i64, tpu.core_type = #tpu.core_type<tc>, window_params = [{transform_indices = @transform_0, window_bounds = array<i64: 8, 128>}, {pipeline_mode = #tpu.pipeline_mode<synchronous>, transform_indices = @transform_1, window_bounds = array<i64: 5, 128, 128>}, {pipeline_mode = #tpu.pipeline_mode<synchronous>, transform_indices = @transform_2, window_bounds = array<i64: 5, 1, 128>}, {transform_indices = @transform_3, window_bounds = array<i64: 8, 128>}]} {
    %c0 = arith.constant 0 : index
    %c0_0 = arith.constant 0 : index
    %0 = vector.load %arg1[%c0, %c0_0] : memref<8x128xf32, #tpu.memory_space<vmem>>, vector<8x128xf32>
    %c0_1 = arith.constant 0 : index
    %c0_2 = arith.constant 0 : index
    %c0_3 = arith.constant 0 : index
    %1 = vector.load %arg2[%c0_1, %c0_2, %c0_3] : memref<5x128x128xf32, #tpu.memory_space<vmem>>, vector<1x128x128xf32>
    %2 = vector.shape_cast %1 : vector<1x128x128xf32> to vector<128x128xf32>
    %cst = arith.constant dense<0.000000e+00> : vector<8x128xf32>
    %3 = tpu.matmul %0, %2, %cst {dimension_numbers = #tpu.dot_dimension_numbers<[1], [0], [0], [1], [0, 0, 1, 1], [], []>} : vector<8x128xf32>, vector<128x128xf32>, vector<8x128xf32> -> vector<8x128xf32>
    %c0_4 = arith.constant 0 : index
    %c0_5 = arith.constant 0 : index
    %c0_6 = arith.constant 0 : index
    %4 = vector.load %arg3[%c0_4, %c0_5, %c0_6] : memref<5x1x128xf32, #tpu.memory_space<vmem>>, vector<1x1x128xf32>
    %5 = vector.shape_cast %4 : vector<1x1x128xf32> to vector<1x128xf32>
    %6 = vector.broadcast %5 : vector<1x128xf32> to vector<8x128xf32>
    %7 = arith.addf %3, %6 : vector<8x128xf32>
    %cst_7 = arith.constant 0.000000e+00 : f32
    %8 = vector.broadcast %cst_7 : f32 to vector<8x128xf32>
    %9 = arith.maximumf %7, %8 : vector<8x128xf32>
    %c1 = arith.constant 1 : index
    %c0_8 = arith.constant 0 : index
    %c0_9 = arith.constant 0 : index
    %10 = vector.load %arg2[%c1, %c0_8, %c0_9] : memref<5x128x128xf32, #tpu.memory_space<vmem>>, vector<1x128x128xf32>
    %11 = vector.shape_cast %10 : vector<1x128x128xf32> to vector<128x128xf32>
    %cst_10 = arith.constant dense<0.000000e+00> : vector<8x128xf32>
    %12 = tpu.matmul %9, %11, %cst_10 {dimension_numbers = #tpu.dot_dimension_numbers<[1], [0], [0], [1], [0, 0, 1, 1], [], []>} : vector<8x128xf32>, vector<128x128xf32>, vector<8x128xf32> -> vector<8x128xf32>
    %c1_11 = arith.constant 1 : index
    %c0_12 = arith.constant 0 : index
    %c0_13 = arith.constant 0 : index
    %13 = vector.load %arg3[%c1_11, %c0_12, %c0_13] : memref<5x1x128xf32, #tpu.memory_space<vmem>>, vector<1x1x128xf32>
    %14 = vector.shape_cast %13 : vector<1x1x128xf32> to vector<1x128xf32>
    %15 = vector.broadcast %14 : vector<1x128xf32> to vector<8x128xf32>
    %16 = arith.addf %12, %15 : vector<8x128xf32>
    %cst_14 = arith.constant 0.000000e+00 : f32
    %17 = vector.broadcast %cst_14 : f32 to vector<8x128xf32>
    %18 = arith.maximumf %16, %17 : vector<8x128xf32>
    %c2 = arith.constant 2 : index
    %c0_15 = arith.constant 0 : index
    %c0_16 = arith.constant 0 : index
    %19 = vector.load %arg2[%c2, %c0_15, %c0_16] : memref<5x128x128xf32, #tpu.memory_space<vmem>>, vector<1x128x128xf32>
    %20 = vector.shape_cast %19 : vector<1x128x128xf32> to vector<128x128xf32>
    %cst_17 = arith.constant dense<0.000000e+00> : vector<8x128xf32>
    %21 = tpu.matmul %18, %20, %cst_17 {dimension_numbers = #tpu.dot_dimension_numbers<[1], [0], [0], [1], [0, 0, 1, 1], [], []>} : vector<8x128xf32>, vector<128x128xf32>, vector<8x128xf32> -> vector<8x128xf32>
    %c2_18 = arith.constant 2 : index
    %c0_19 = arith.constant 0 : index
    %c0_20 = arith.constant 0 : index
    %22 = vector.load %arg3[%c2_18, %c0_19, %c0_20] : memref<5x1x128xf32, #tpu.memory_space<vmem>>, vector<1x1x128xf32>
    %23 = vector.shape_cast %22 : vector<1x1x128xf32> to vector<1x128xf32>
    %24 = vector.broadcast %23 : vector<1x128xf32> to vector<8x128xf32>
    %25 = arith.addf %21, %24 : vector<8x128xf32>
    %cst_21 = arith.constant 0.000000e+00 : f32
    %26 = vector.broadcast %cst_21 : f32 to vector<8x128xf32>
    %27 = arith.maximumf %25, %26 : vector<8x128xf32>
    %c3 = arith.constant 3 : index
    %c0_22 = arith.constant 0 : index
    %c0_23 = arith.constant 0 : index
    %28 = vector.load %arg2[%c3, %c0_22, %c0_23] : memref<5x128x128xf32, #tpu.memory_space<vmem>>, vector<1x128x128xf32>
    %29 = vector.shape_cast %28 : vector<1x128x128xf32> to vector<128x128xf32>
    %cst_24 = arith.constant dense<0.000000e+00> : vector<8x128xf32>
    %30 = tpu.matmul %27, %29, %cst_24 {dimension_numbers = #tpu.dot_dimension_numbers<[1], [0], [0], [1], [0, 0, 1, 1], [], []>} : vector<8x128xf32>, vector<128x128xf32>, vector<8x128xf32> -> vector<8x128xf32>
    %c3_25 = arith.constant 3 : index
    %c0_26 = arith.constant 0 : index
    %c0_27 = arith.constant 0 : index
    %31 = vector.load %arg3[%c3_25, %c0_26, %c0_27] : memref<5x1x128xf32, #tpu.memory_space<vmem>>, vector<1x1x128xf32>
    %32 = vector.shape_cast %31 : vector<1x1x128xf32> to vector<1x128xf32>
    %33 = vector.broadcast %32 : vector<1x128xf32> to vector<8x128xf32>
    %34 = arith.addf %30, %33 : vector<8x128xf32>
    %cst_28 = arith.constant 0.000000e+00 : f32
    %35 = vector.broadcast %cst_28 : f32 to vector<8x128xf32>
    %36 = arith.maximumf %34, %35 : vector<8x128xf32>
    %c4 = arith.constant 4 : index
    %c0_29 = arith.constant 0 : index
    %c0_30 = arith.constant 0 : index
    %37 = vector.load %arg2[%c4, %c0_29, %c0_30] : memref<5x128x128xf32, #tpu.memory_space<vmem>>, vector<1x128x128xf32>
    %38 = vector.shape_cast %37 : vector<1x128x128xf32> to vector<128x128xf32>
    %cst_31 = arith.constant dense<0.000000e+00> : vector<8x128xf32>
    %39 = tpu.matmul %36, %38, %cst_31 {dimension_numbers = #tpu.dot_dimension_numbers<[1], [0], [0], [1], [0, 0, 1, 1], [], []>} : vector<8x128xf32>, vector<128x128xf32>, vector<8x128xf32> -> vector<8x128xf32>
    %c4_32 = arith.constant 4 : index
    %c0_33 = arith.constant 0 : index
    %c0_34 = arith.constant 0 : index
    %40 = vector.load %arg3[%c4_32, %c0_33, %c0_34] : memref<5x1x128xf32, #tpu.memory_space<vmem>>, vector<1x1x128xf32>
    %41 = vector.shape_cast %40 : vector<1x1x128xf32> to vector<1x128xf32>
    %42 = vector.broadcast %41 : vector<1x128xf32> to vector<8x128xf32>
    %43 = arith.addf %39, %42 : vector<8x128xf32>
    %44 = arith.negf %43 : vector<8x128xf32>
    %45 = math.exp %44 : vector<8x128xf32>
    %cst_35 = arith.constant 1.000000e+00 : f32
    %46 = vector.broadcast %cst_35 : f32 to vector<8x128xf32>
    %47 = arith.addf %46, %45 : vector<8x128xf32>
    %48 = arith.divf %46, %47 : vector<8x128xf32>
    %c0_36 = arith.constant 0 : index
    %c0_37 = arith.constant 0 : index
    %49 = vector.load %arg4[%c0_36, %c0_37] : memref<8x128xf32, #tpu.memory_space<vmem>>, vector<8x128xf32>
    tpu.vector_store %arg4[%c0_36, %c0_37], %48 {strides = array<i32>} : memref<8x128xf32, #tpu.memory_space<vmem>>, vector<8x128xf32>,
    return
  }
  func.func @transform_0(%arg0: i32) -> (i32, i32) {
    %c0_i32 = arith.constant 0 : i32
    %c0_i32_0 = arith.constant 0 : i32
    return %arg0, %c0_i32 : i32, i32
  }
  func.func @transform_1(%arg0: i32) -> (i32, i32, i32) {
    %c0_i32 = arith.constant 0 : i32
    %c0_i32_0 = arith.constant 0 : i32
    %c0_i32_1 = arith.constant 0 : i32
    %c0_i32_2 = arith.constant 0 : i32
    return %c0_i32, %c0_i32_0, %c0_i32_1 : i32, i32, i32
  }
  func.func @transform_2(%arg0: i32) -> (i32, i32, i32) {
    %c0_i32 = arith.constant 0 : i32
    %c0_i32_0 = arith.constant 0 : i32
    %c0_i32_1 = arith.constant 0 : i32
    %c0_i32_2 = arith.constant 0 : i32
    return %c0_i32, %c0_i32_0, %c0_i32_1 : i32, i32, i32
  }
  func.func @transform_3(%arg0: i32) -> (i32, i32) {
    %c0_i32 = arith.constant 0 : i32
    %c0_i32_0 = arith.constant 0 : i32
    return %arg0, %c0_i32 : i32, i32
  }
}

</mosaic_0001>

<llo_original>
// kernel: dnn_adult_forward.1
$region0: #{dnn_adult_forward.1}
  #allocation0 [shape = 'u32[]', space=smem, size = 0x4, offset = 0x4, fixed_abs, tag = 'smem constant byte address 0x4 - core index']
  #allocation1 [shape = 'u32[144,128]{1,0:T(1,128)}', space=vmem, size = 0x12000, scoped, tag = 'internal scratch']
  %s0 = inlined_call_operand.vmem [shape: f32[8,128], index: 0, kind: input, shape index: {}]
  %s1 = inlined_call_operand.hbm [shape: f32[5,128,128], index: 1, kind: input, shape index: {}]
  %s2 = inlined_call_operand.vmem [shape: f32[5,1,128], index: 2, kind: input, shape index: {}]
  %s3 = inlined_call_operand.vmem [shape: f32[8,128], index: 3, kind: output, shape index: {}]
  %s4 = sld [smem:[#allocation0]]
  $region26: #{dnn_adult_forward.1} parent=0
    _
  %s6 = ssub.s32 1, %s4
  %s7 = scalar_select 0, %s6, %s4
  $region1: #{dnn_adult_forward.1} parent=0
    #allocation2 [shape = 'u8[327680]{0}', space=vmem, size = 0x50000, scoped, tag = 'input window, operand 1, single buffered']
    #allocation3 [shape = 's32[1]{0}', space=sflag, size = 0x4, scoped, tag = 'scoped memory for dnn_adult_forward.1']
    %8 = vsyncpa [#allocation3], 0
    // Predicated region
    $region2: #{dnn_adult_forward.1} parent=1 // pred_check
      _
    $region3: #{dnn_adult_forward.1} parent=1 // pred_check_branch
      %10 = sbr.rel (0) target = $region5
    $region4: #{dnn_adult_forward.1} parent=1 // pred_region
      _
    $region5: #{dnn_adult_forward.1} parent=1 // pred_fallthru
      _
    // Predicated region
    $region6: #{dnn_adult_forward.1} parent=1 // pred_check
      _
    $region7: #{dnn_adult_forward.1} parent=1 // pred_check_branch
      %12 = sbr.rel (0) target = $region9
    $region8: #{dnn_adult_forward.1} parent=1 // pred_region
      %s14 = ssub.s32 10240, 10240
      %15 = vsyncadd [#allocation3], %s14
      %s16 = sshll.u32 [#allocation2], 4
      %s17 = int_to_ptr.vmem [resolvable:$true] %s16
      %22 = dma.hbm_to_vmem [thread:$0]  %s1, 10240, %s17, [#allocation3], 128, 128, 8
    $region9: #{dnn_adult_forward.1} parent=1 // pred_fallthru
      _
    // Predicated region
    $region10: #{dnn_adult_forward.1} parent=1 // pred_check
      _
    $region11: #{dnn_adult_forward.1} parent=1 // pred_check_branch
      %24 = sbr.rel (0) target = $region13
    $region12: #{dnn_adult_forward.1} parent=1 // pred_region
      _
    $region13: #{dnn_adult_forward.1} parent=1 // pred_fallthru
      _
    // Predicated region
    $region14: #{dnn_adult_forward.1} parent=1 // pred_check
      _
    $region15: #{dnn_adult_forward.1} parent=1 // pred_check_branch
      %26 = sbr.rel (0) target = $region17
    $region16: #{dnn_adult_forward.1} parent=1 // pred_region
      %27 = dma.done [#allocation3], 10240
    $region17: #{dnn_adult_forward.1} parent=1 // pred_fallthru
      _
    %v28 = vld [vmem:[%s0] sm:$0xff]
    %v29 = vld [vmem:[#allocation2] sm:$0xff]
    %v30 = vld [vmem:[#allocation2 + $0x8] sm:$0xff]
    %v31 = vld [vmem:[#allocation2 + $0x10] sm:$0xff]
    %v32 = vld [vmem:[#allocation2 + $0x18] sm:$0xff]
    %v33 = vld [vmem:[#allocation2 + $0x20] sm:$0xff]
    %v34 = vld [vmem:[#allocation2 + $0x28] sm:$0xff]
    %v35 = vld [vmem:[#allocation2 + $0x30] sm:$0xff]
    %v36 = vld [vmem:[#allocation2 + $0x38] sm:$0xff]
    %v37 = vld [vmem:[#allocation2 + $0x40] sm:$0xff]
    %v38 = vld [vmem:[#allocation2 + $0x48] sm:$0xff]
    %v39 = vld [vmem:[#allocation2 + $0x50] sm:$0xff]
    %v40 = vld [vmem:[#allocation2 + $0x58] sm:$0xff]
    %v41 = vld [vmem:[#allocation2 + $0x60] sm:$0xff]
    %v42 = vld [vmem:[#allocation2 + $0x68] sm:$0xff]
    %v43 = vld [vmem:[#allocation2 + $0x70] sm:$0xff]
    %v44 = vld [vmem:[#allocation2 + $0x78] sm:$0xff]
    %v45 = vld [vmem:[%s2] sm:$0x1]
    %v47 = vlaneseq
    %v48 = vshrl.u32 %v47, 7
    %v49 = vsub.s32 0, %v48
    %v50 = vrot.slane %v45, %v49
    %52 = vmatprep.subr.mxu0 0.0
    %53 = vmatpush1.msra.mxu0 %v29
    %54 = vmatprep.subr.mxu0 0.0
    %55 = vmatpush1.msra.mxu0 %v30
    %56 = vmatprep.subr.mxu0 0.0
    %57 = vmatpush1.msra.mxu0 %v31
    %58 = vmatprep.subr.mxu0 0.0
    %59 = vmatpush1.msra.mxu0 %v32
    %60 = vmatprep.subr.mxu0 0.0
    %61 = vmatpush1.msra.mxu0 %v33
    %62 = vmatprep.subr.mxu0 0.0
    %63 = vmatpush1.msra.mxu0 %v34
    %64 = vmatprep.subr.mxu0 0.0
    %65 = vmatpush1.msra.mxu0 %v35
    %66 = vmatprep.subr.mxu0 0.0
    %67 = vmatpush1.msra.mxu0 %v36
    %68 = vmatprep.subr.mxu0 0.0
    %69 = vmatpush1.msra.mxu0 %v37
    %70 = vmatprep.subr.mxu0 0.0
    %71 = vmatpush1.msra.mxu0 %v38
    %72 = vmatprep.subr.mxu0 0.0
    %73 = vmatpush1.msra.mxu0 %v39
    %74 = vmatprep.subr.mxu0 0.0
    %75 = vmatpush1.msra.mxu0 %v40
    %76 = vmatprep.subr.mxu0 0.0
    %77 = vmatpush1.msra.mxu0 %v41
    %78 = vmatprep.subr.mxu0 0.0
    %79 = vmatpush1.msra.mxu0 %v42
    %80 = vmatprep.subr.mxu0 0.0
    %81 = vmatpush1.msra.mxu0 %v43
    %82 = vmatprep.subr.mxu0 0.0
    %83 = vmatpush1.msra.mxu0 %v44
    %84 = vmatprep.subr.mxu0 0.0
    %85 = vmatpush1.msra.mxu0 0.0
    %86 = vmatprep.subr.mxu0 0.0
    %87 = vmatpush1.msra.mxu0 0.0
    %88 = vmatprep.subr.mxu0 0.0
    %89 = vmatpush1.msra.mxu0 0.0
    %90 = vmatprep.subr.mxu0 0.0
    %91 = vmatpush1.msra.mxu0 0.0
    %92 = vmatprep.subr.mxu0 0.0
    %93 = vmatpush1.msra.mxu0 0.0
    %94 = vmatprep.subr.mxu0 0.0
    %95 = vmatpush1.msra.mxu0 0.0
    %96 = vmatprep.subr.mxu0 0.0
    %97 = vmatpush1.msra.mxu0 0.0
    %98 = vmatprep.subr.mxu0 0.0
    %99 = vmatpush1.msra.mxu0 0.0
    %100 = vmatprep.subr.mxu0 0.0
    %101 = vmatpush1.msra.mxu0 0.0
    %102 = vmatprep.subr.mxu0 0.0
    %103 = vmatpush1.msra.mxu0 0.0
    %104 = vmatprep.subr.mxu0 0.0
    %105 = vmatpush1.msra.mxu0 0.0
    %106 = vmatprep.subr.mxu0 0.0
    %107 = vmatpush1.msra.mxu0 0.0
    %108 = vmatprep.subr.mxu0 0.0
    %109 = vmatpush1.msra.mxu0 0.0
    %110 = vmatprep.subr.mxu0 0.0
    %111 = vmatpush1.msra.mxu0 0.0
    %112 = vmatprep.subr.mxu0 0.0
    %113 = vmatpush1.msra.mxu0 0.0
    %114 = vmatprep.subr.mxu0 0.0
    %115 = vmatpush1.msra.mxu0 0.0
    %116 = vmatprep.mubr.f32.mxu0 0.0
    %117 = vmatmul.mubr.f32.gmra.mrb[0].mxu0 %v28
    %v118 = vpop.f32.mrb[0].mxu0
    %v119 = vadd.f32 %v50, %v118
    %v120 = vpop.f32.mrb[0].mxu0
    %121 = vdwg.mxu0
    %v122 = vmax.f32 %v119, 0.0
    %s123 = scalar_lea.vmem [#allocation2], 128
    %v124 = vld [vmem:[%s123] sm:$0xff]
    %v125 = vld [vmem:[%s123 + $0x8] sm:$0xff]
    %v126 = vld [vmem:[%s123 + $0x10] sm:$0xff]
    %v127 = vld [vmem:[%s123 + $0x18] sm:$0xff]
    %v128 = vld [vmem:[%s123 + $0x20] sm:$0xff]
    %v129 = vld [vmem:[%s123 + $0x28] sm:$0xff]
    %v130 = vld [vmem:[%s123 + $0x30] sm:$0xff]
    %v131 = vld [vmem:[%s123 + $0x38] sm:$0xff]
    %v132 = vld [vmem:[%s123 + $0x40] sm:$0xff]
    %v133 = vld [vmem:[%s123 + $0x48] sm:$0xff]
    %v134 = vld [vmem:[%s123 + $0x50] sm:$0xff]
    %v135 = vld [vmem:[%s123 + $0x58] sm:$0xff]
    %v136 = vld [vmem:[%s123 + $0x60] sm:$0xff]
    %v137 = vld [vmem:[%s123 + $0x68] sm:$0xff]
    %v138 = vld [vmem:[%s123 + $0x70] sm:$0xff]
    %v139 = vld [vmem:[%s123 + $0x78] sm:$0xff]
    %s140 = scalar_lea.vmem %s2, 1
    %v141 = vld [vmem:[%s140] sm:$0x1]
    %v143 = vlaneseq
    %v144 = vshrl.u32 %v143, 7
    %v145 = vsub.s32 0, %v144
    %v146 = vrot.slane %v141, %v145
    %148 = vmatprep.subr.mxu0 0.0
    %149 = vmatpush1.msra.mxu0 %v124
    %150 = vmatprep.subr.mxu0 0.0
    %151 = vmatpush1.msra.mxu0 %v125
    %152 = vmatprep.subr.mxu0 0.0
    %153 = vmatpush1.msra.mxu0 %v126
    %154 = vmatprep.subr.mxu0 0.0
    %155 = vmatpush1.msra.mxu0 %v127
    %156 = vmatprep.subr.mxu0 0.0
    %157 = vmatpush1.msra.mxu0 %v128
    %158 = vmatprep.subr.mxu0 0.0
    %159 = vmatpush1.msra.mxu0 %v129
    %160 = vmatprep.subr.mxu0 0.0
    %161 = vmatpush1.msra.mxu0 %v130
    %162 = vmatprep.subr.mxu0 0.0
    %163 = vmatpush1.msra.mxu0 %v131
    %164 = vmatprep.subr.mxu0 0.0
    %165 = vmatpush1.msra.mxu0 %v132
    %166 = vmatprep.subr.mxu0 0.0
    %167 = vmatpush1.msra.mxu0 %v133
    %168 = vmatprep.subr.mxu0 0.0
    %169 = vmatpush1.msra.mxu0 %v134
    %170 = vmatprep.subr.mxu0 0.0
    %171 = vmatpush1.msra.mxu0 %v135
    %172 = vmatprep.subr.mxu0 0.0
    %173 = vmatpush1.msra.mxu0 %v136
    %174 = vmatprep.subr.mxu0 0.0
    %175 = vmatpush1.msra.mxu0 %v137
    %176 = vmatprep.subr.mxu0 0.0
    %177 = vmatpush1.msra.mxu0 %v138
    %178 = vmatprep.subr.mxu0 0.0
    %179 = vmatpush1.msra.mxu0 %v139
    %180 = vmatprep.subr.mxu0 0.0
    %181 = vmatpush1.msra.mxu0 0.0
    %182 = vmatprep.subr.mxu0 0.0
    %183 = vmatpush1.msra.mxu0 0.0
    %184 = vmatprep.subr.mxu0 0.0
    %185 = vmatpush1.msra.mxu0 0.0
    %186 = vmatprep.subr.mxu0 0.0
    %187 = vmatpush1.msra.mxu0 0.0
    %188 = vmatprep.subr.mxu0 0.0
    %189 = vmatpush1.msra.mxu0 0.0
    %190 = vmatprep.subr.mxu0 0.0
    %191 = vmatpush1.msra.mxu0 0.0
    %192 = vmatprep.subr.mxu0 0.0
    %193 = vmatpush1.msra.mxu0 0.0
    %194 = vmatprep.subr.mxu0 0.0
    %195 = vmatpush1.msra.mxu0 0.0
    %196 = vmatprep.subr.mxu0 0.0
    %197 = vmatpush1.msra.mxu0 0.0
    %198 = vmatprep.subr.mxu0 0.0
    %199 = vmatpush1.msra.mxu0 0.0
    %200 = vmatprep.subr.mxu0 0.0
    %201 = vmatpush1.msra.mxu0 0.0
    %202 = vmatprep.subr.mxu0 0.0
    %203 = vmatpush1.msra.mxu0 0.0
    %204 = vmatprep.subr.mxu0 0.0
    %205 = vmatpush1.msra.mxu0 0.0
    %206 = vmatprep.subr.mxu0 0.0
    %207 = vmatpush1.msra.mxu0 0.0
    %208 = vmatprep.subr.mxu0 0.0
    %209 = vmatpush1.msra.mxu0 0.0
    %210 = vmatprep.subr.mxu0 0.0
    %211 = vmatpush1.msra.mxu0 0.0
    %212 = vmatprep.mubr.f32.mxu0 0.0
    %213 = vmatmul.mubr.f32.gmra.mrb[0].mxu0 %v122
    %v214 = vpop.f32.mrb[0].mxu0
    %v215 = vadd.f32 %v146, %v214
    %v216 = vpop.f32.mrb[0].mxu0
    %217 = vdwg.mxu0
    %v218 = vmax.f32 %v215, 0.0
    %s219 = scalar_lea.vmem [#allocation2], 256
    %v220 = vld [vmem:[%s219] sm:$0xff]
    %v221 = vld [vmem:[%s219 + $0x8] sm:$0xff]
    %v222 = vld [vmem:[%s219 + $0x10] sm:$0xff]
    %v223 = vld [vmem:[%s219 + $0x18] sm:$0xff]
    %v224 = vld [vmem:[%s219 + $0x20] sm:$0xff]
    %v225 = vld [vmem:[%s219 + $0x28] sm:$0xff]
    %v226 = vld [vmem:[%s219 + $0x30] sm:$0xff]
    %v227 = vld [vmem:[%s219 + $0x38] sm:$0xff]
    %v228 = vld [vmem:[%s219 + $0x40] sm:$0xff]
    %v229 = vld [vmem:[%s219 + $0x48] sm:$0xff]
    %v230 = vld [vmem:[%s219 + $0x50] sm:$0xff]
    %v231 = vld [vmem:[%s219 + $0x58] sm:$0xff]
    %v232 = vld [vmem:[%s219 + $0x60] sm:$0xff]
    %v233 = vld [vmem:[%s219 + $0x68] sm:$0xff]
    %v234 = vld [vmem:[%s219 + $0x70] sm:$0xff]
    %v235 = vld [vmem:[%s219 + $0x78] sm:$0xff]
    %s236 = scalar_lea.vmem %s2, 2
    %v237 = vld [vmem:[%s236] sm:$0x1]
    %v239 = vlaneseq
    %v240 = vshrl.u32 %v239, 7
    %v241 = vsub.s32 0, %v240
    %v242 = vrot.slane %v237, %v241
    %244 = vmatprep.subr.mxu0 0.0
    %245 = vmatpush1.msra.mxu0 %v220
    %246 = vmatprep.subr.mxu0 0.0
    %247 = vmatpush1.msra.mxu0 %v221
    %248 = vmatprep.subr.mxu0 0.0
    %249 = vmatpush1.msra.mxu0 %v222
    %250 = vmatprep.subr.mxu0 0.0
    %251 = vmatpush1.msra.mxu0 %v223
    %252 = vmatprep.subr.mxu0 0.0
    %253 = vmatpush1.msra.mxu0 %v224
    %254 = vmatprep.subr.mxu0 0.0
    %255 = vmatpush1.msra.mxu0 %v225
    %256 = vmatprep.subr.mxu0 0.0
    %257 = vmatpush1.msra.mxu0 %v226
    %258 = vmatprep.subr.mxu0 0.0
    %259 = vmatpush1.msra.mxu0 %v227
    %260 = vmatprep.subr.mxu0 0.0
    %261 = vmatpush1.msra.mxu0 %v228
    %262 = vmatprep.subr.mxu0 0.0
    %263 = vmatpush1.msra.mxu0 %v229
    %264 = vmatprep.subr.mxu0 0.0
    %265 = vmatpush1.msra.mxu0 %v230
    %266 = vmatprep.subr.mxu0 0.0
    %267 = vmatpush1.msra.mxu0 %v231
    %268 = vmatprep.subr.mxu0 0.0
    %269 = vmatpush1.msra.mxu0 %v232
    %270 = vmatprep.subr.mxu0 0.0
    %271 = vmatpush1.msra.mxu0 %v233
    %272 = vmatprep.subr.mxu0 0.0
    %273 = vmatpush1.msra.mxu0 %v234
    %274 = vmatprep.subr.mxu0 0.0
    %275 = vmatpush1.msra.mxu0 %v235
    %276 = vmatprep.subr.mxu0 0.0
    %277 = vmatpush1.msra.mxu0 0.0
    %278 = vmatprep.subr.mxu0 0.0
    %279 = vmatpush1.msra.mxu0 0.0
    %280 = vmatprep.subr.mxu0 0.0
    %281 = vmatpush1.msra.mxu0 0.0
    %282 = vmatprep.subr.mxu0 0.0
    %283 = vmatpush1.msra.mxu0 0.0
    %284 = vmatprep.subr.mxu0 0.0
    %285 = vmatpush1.msra.mxu0 0.0
    %286 = vmatprep.subr.mxu0 0.0
    %287 = vmatpush1.msra.mxu0 0.0
    %288 = vmatprep.subr.mxu0 0.0
    %289 = vmatpush1.msra.mxu0 0.0
    %290 = vmatprep.subr.mxu0 0.0
    %291 = vmatpush1.msra.mxu0 0.0
    %292 = vmatprep.subr.mxu0 0.0
    %293 = vmatpush1.msra.mxu0 0.0
    %294 = vmatprep.subr.mxu0 0.0
    %295 = vmatpush1.msra.mxu0 0.0
    %296 = vmatprep.subr.mxu0 0.0
    %297 = vmatpush1.msra.mxu0 0.0
    %298 = vmatprep.subr.mxu0 0.0
    %299 = vmatpush1.msra.mxu0 0.0
    %300 = vmatprep.subr.mxu0 0.0
    %301 = vmatpush1.msra.mxu0 0.0
    %302 = vmatprep.subr.mxu0 0.0
    %303 = vmatpush1.msra.mxu0 0.0
    %304 = vmatprep.subr.mxu0 0.0
    %305 = vmatpush1.msra.mxu0 0.0
    %306 = vmatprep.subr.mxu0 0.0
    %307 = vmatpush1.msra.mxu0 0.0
    %308 = vmatprep.mubr.f32.mxu0 0.0
    %309 = vmatmul.mubr.f32.gmra.mrb[0].mxu0 %v218
    %v310 = vpop.f32.mrb[0].mxu0
    %v311 = vadd.f32 %v242, %v310
    %v312 = vpop.f32.mrb[0].mxu0
    %313 = vdwg.mxu0
    %v314 = vmax.f32 %v311, 0.0
    %s315 = scalar_lea.vmem [#allocation2], 384
    %v316 = vld [vmem:[%s315] sm:$0xff]
    %v317 = vld [vmem:[%s315 + $0x8] sm:$0xff]
    %v318 = vld [vmem:[%s315 + $0x10] sm:$0xff]
    %v319 = vld [vmem:[%s315 + $0x18] sm:$0xff]
    %v320 = vld [vmem:[%s315 + $0x20] sm:$0xff]
    %v321 = vld [vmem:[%s315 + $0x28] sm:$0xff]
    %v322 = vld [vmem:[%s315 + $0x30] sm:$0xff]
    %v323 = vld [vmem:[%s315 + $0x38] sm:$0xff]
    %v324 = vld [vmem:[%s315 + $0x40] sm:$0xff]
    %v325 = vld [vmem:[%s315 + $0x48] sm:$0xff]
    %v326 = vld [vmem:[%s315 + $0x50] sm:$0xff]
    %v327 = vld [vmem:[%s315 + $0x58] sm:$0xff]
    %v328 = vld [vmem:[%s315 + $0x60] sm:$0xff]
    %v329 = vld [vmem:[%s315 + $0x68] sm:$0xff]
    %v330 = vld [vmem:[%s315 + $0x70] sm:$0xff]
    %v331 = vld [vmem:[%s315 + $0x78] sm:$0xff]
    %s332 = scalar_lea.vmem %s2, 3
    %v333 = vld [vmem:[%s332] sm:$0x1]
    %v335 = vlaneseq
    %v336 = vshrl.u32 %v335, 7
    %v337 = vsub.s32 0, %v336
    %v338 = vrot.slane %v333, %v337
    %340 = vmatprep.subr.mxu0 0.0
    %341 = vmatpush1.msra.mxu0 %v316
    %342 = vmatprep.subr.mxu0 0.0
    %343 = vmatpush1.msra.mxu0 %v317
    %344 = vmatprep.subr.mxu0 0.0
    %345 = vmatpush1.msra.mxu0 %v318
    %346 = vmatprep.subr.mxu0 0.0
    %347 = vmatpush1.msra.mxu0 %v319
    %348 = vmatprep.subr.mxu0 0.0
    %349 = vmatpush1.msra.mxu0 %v320
    %350 = vmatprep.subr.mxu0 0.0
    %351 = vmatpush1.msra.mxu0 %v321
    %352 = vmatprep.subr.mxu0 0.0
    %353 = vmatpush1.msra.mxu0 %v322
    %354 = vmatprep.subr.mxu0 0.0
    %355 = vmatpush1.msra.mxu0 %v323
    %356 = vmatprep.subr.mxu0 0.0
    %357 = vmatpush1.msra.mxu0 %v324
    %358 = vmatprep.subr.mxu0 0.0
    %359 = vmatpush1.msra.mxu0 %v325
    %360 = vmatprep.subr.mxu0 0.0
    %361 = vmatpush1.msra.mxu0 %v326
    %362 = vmatprep.subr.mxu0 0.0
    %363 = vmatpush1.msra.mxu0 %v327
    %364 = vmatprep.subr.mxu0 0.0
    %365 = vmatpush1.msra.mxu0 %v328
    %366 = vmatprep.subr.mxu0 0.0
    %367 = vmatpush1.msra.mxu0 %v329
    %368 = vmatprep.subr.mxu0 0.0
    %369 = vmatpush1.msra.mxu0 %v330
    %370 = vmatprep.subr.mxu0 0.0
    %371 = vmatpush1.msra.mxu0 %v331
    %372 = vmatprep.subr.mxu0 0.0
    %373 = vmatpush1.msra.mxu0 0.0
    %374 = vmatprep.subr.mxu0 0.0
    %375 = vmatpush1.msra.mxu0 0.0
    %376 = vmatprep.subr.mxu0 0.0
    %377 = vmatpush1.msra.mxu0 0.0
    %378 = vmatprep.subr.mxu0 0.0
    %379 = vmatpush1.msra.mxu0 0.0
    %380 = vmatprep.subr.mxu0 0.0
    %381 = vmatpush1.msra.mxu0 0.0
    %382 = vmatprep.subr.mxu0 0.0
    %383 = vmatpush1.msra.mxu0 0.0
    %384 = vmatprep.subr.mxu0 0.0
    %385 = vmatpush1.msra.mxu0 0.0
    %386 = vmatprep.subr.mxu0 0.0
    %387 = vmatpush1.msra.mxu0 0.0
    %388 = vmatprep.subr.mxu0 0.0
    %389 = vmatpush1.msra.mxu0 0.0
    %390 = vmatprep.subr.mxu0 0.0
    %391 = vmatpush1.msra.mxu0 0.0
    %392 = vmatprep.subr.mxu0 0.0
    %393 = vmatpush1.msra.mxu0 0.0
    %394 = vmatprep.subr.mxu0 0.0
    %395 = vmatpush1.msra.mxu0 0.0
    %396 = vmatprep.subr.mxu0 0.0
    %397 = vmatpush1.msra.mxu0 0.0
    %398 = vmatprep.subr.mxu0 0.0
    %399 = vmatpush1.msra.mxu0 0.0
    %400 = vmatprep.subr.mxu0 0.0
    %401 = vmatpush1.msra.mxu0 0.0
    %402 = vmatprep.subr.mxu0 0.0
    %403 = vmatpush1.msra.mxu0 0.0
    %404 = vmatprep.mubr.f32.mxu0 0.0
    %405 = vmatmul.mubr.f32.gmra.mrb[0].mxu0 %v314
    %v406 = vpop.f32.mrb[0].mxu0
    %v407 = vadd.f32 %v338, %v406
    %v408 = vpop.f32.mrb[0].mxu0
    %409 = vdwg.mxu0
    %v410 = vmax.f32 %v407, 0.0
    %s411 = scalar_lea.vmem [#allocation2], 512
    %v412 = vld [vmem:[%s411] sm:$0xff]
    %v413 = vld [vmem:[%s411 + $0x8] sm:$0xff]
    %v414 = vld [vmem:[%s411 + $0x10] sm:$0xff]
    %v415 = vld [vmem:[%s411 + $0x18] sm:$0xff]
    %v416 = vld [vmem:[%s411 + $0x20] sm:$0xff]
    %v417 = vld [vmem:[%s411 + $0x28] sm:$0xff]
    %v418 = vld [vmem:[%s411 + $0x30] sm:$0xff]
    %v419 = vld [vmem:[%s411 + $0x38] sm:$0xff]
    %v420 = vld [vmem:[%s411 + $0x40] sm:$0xff]
    %v421 = vld [vmem:[%s411 + $0x48] sm:$0xff]
    %v422 = vld [vmem:[%s411 + $0x50] sm:$0xff]
    %v423 = vld [vmem:[%s411 + $0x58] sm:$0xff]
    %v424 = vld [vmem:[%s411 + $0x60] sm:$0xff]
    %v425 = vld [vmem:[%s411 + $0x68] sm:$0xff]
    %v426 = vld [vmem:[%s411 + $0x70] sm:$0xff]
    %v427 = vld [vmem:[%s411 + $0x78] sm:$0xff]
    %s428 = scalar_lea.vmem %s2, 4
    %v429 = vld [vmem:[%s428] sm:$0x1]
    %v431 = vlaneseq
    %v432 = vshrl.u32 %v431, 7
    %v433 = vsub.s32 0, %v432
    %v434 = vrot.slane %v429, %v433
    %436 = vmatprep.subr.mxu0 0.0
    %437 = vmatpush1.msra.mxu0 %v412
    %438 = vmatprep.subr.mxu0 0.0
    %439 = vmatpush1.msra.mxu0 %v413
    %440 = vmatprep.subr.mxu0 0.0
    %441 = vmatpush1.msra.mxu0 %v414
    %442 = vmatprep.subr.mxu0 0.0
    %443 = vmatpush1.msra.mxu0 %v415
    %444 = vmatprep.subr.mxu0 0.0
    %445 = vmatpush1.msra.mxu0 %v416
    %446 = vmatprep.subr.mxu0 0.0
    %447 = vmatpush1.msra.mxu0 %v417
    %448 = vmatprep.subr.mxu0 0.0
    %449 = vmatpush1.msra.mxu0 %v418
    %450 = vmatprep.subr.mxu0 0.0
    %451 = vmatpush1.msra.mxu0 %v419
    %452 = vmatprep.subr.mxu0 0.0
    %453 = vmatpush1.msra.mxu0 %v420
    %454 = vmatprep.subr.mxu0 0.0
    %455 = vmatpush1.msra.mxu0 %v421
    %456 = vmatprep.subr.mxu0 0.0
    %457 = vmatpush1.msra.mxu0 %v422
    %458 = vmatprep.subr.mxu0 0.0
    %459 = vmatpush1.msra.mxu0 %v423
    %460 = vmatprep.subr.mxu0 0.0
    %461 = vmatpush1.msra.mxu0 %v424
    %462 = vmatprep.subr.mxu0 0.0
    %463 = vmatpush1.msra.mxu0 %v425
    %464 = vmatprep.subr.mxu0 0.0
    %465 = vmatpush1.msra.mxu0 %v426
    %466 = vmatprep.subr.mxu0 0.0
    %467 = vmatpush1.msra.mxu0 %v427
    %468 = vmatprep.subr.mxu0 0.0
    %469 = vmatpush1.msra.mxu0 0.0
    %470 = vmatprep.subr.mxu0 0.0
    %471 = vmatpush1.msra.mxu0 0.0
    %472 = vmatprep.subr.mxu0 0.0
    %473 = vmatpush1.msra.mxu0 0.0
    %474 = vmatprep.subr.mxu0 0.0
    %475 = vmatpush1.msra.mxu0 0.0
    %476 = vmatprep.subr.mxu0 0.0
    %477 = vmatpush1.msra.mxu0 0.0
    %478 = vmatprep.subr.mxu0 0.0
    %479 = vmatpush1.msra.mxu0 0.0
    %480 = vmatprep.subr.mxu0 0.0
    %481 = vmatpush1.msra.mxu0 0.0
    %482 = vmatprep.subr.mxu0 0.0
    %483 = vmatpush1.msra.mxu0 0.0
    %484 = vmatprep.subr.mxu0 0.0
    %485 = vmatpush1.msra.mxu0 0.0
    %486 = vmatprep.subr.mxu0 0.0
    %487 = vmatpush1.msra.mxu0 0.0
    %488 = vmatprep.subr.mxu0 0.0
    %489 = vmatpush1.msra.mxu0 0.0
    %490 = vmatprep.subr.mxu0 0.0
    %491 = vmatpush1.msra.mxu0 0.0
    %492 = vmatprep.subr.mxu0 0.0
    %493 = vmatpush1.msra.mxu0 0.0
    %494 = vmatprep.subr.mxu0 0.0
    %495 = vmatpush1.msra.mxu0 0.0
    %496 = vmatprep.subr.mxu0 0.0
    %497 = vmatpush1.msra.mxu0 0.0
    %498 = vmatprep.subr.mxu0 0.0
    %499 = vmatpush1.msra.mxu0 0.0
    %500 = vmatprep.mubr.f32.mxu0 0.0
    %501 = vmatmul.mubr.f32.gmra.mrb[0].mxu0 %v410
    %v502 = vpop.f32.mrb[0].mxu0
    %v503 = vadd.f32 %v434, %v502
    %v504 = vpop.f32.mrb[0].mxu0
    %505 = vdwg.mxu0
    %v506 = vxor.u32 %v503, 2147483648
    %v507 = vmul.f32 %v506, 1.442695
    %v508 = vpow.pop %v507
    %v509 = vadd.f32 %v508, 1.0
    %v510 = vrcp.pop %v509
    %v511 = vmul.f32 1.0, %v510
    %512 = vst [vmem:[%s3] sm:$0xff] %v511
    // Predicated region
    $region18: #{dnn_adult_forward.1} parent=1 // pred_check
      _
    $region19: #{dnn_adult_forward.1} parent=1 // pred_check_branch
      %514 = sbr.rel (0) target = $region21
    $region20: #{dnn_adult_forward.1} parent=1 // pred_region
      _
    $region21: #{dnn_adult_forward.1} parent=1 // pred_fallthru
      _
    // Predicated region
    $region22: #{dnn_adult_forward.1} parent=1 // pred_check
      _
    $region23: #{dnn_adult_forward.1} parent=1 // pred_check_branch
      %516 = sbr.rel (0) target = $region25
    $region24: #{dnn_adult_forward.1} parent=1 // pred_region
      _
    $region25: #{dnn_adult_forward.1} parent=1 // pred_fallthru
      _
    %517 = vsyncpa [#allocation3], 1

</llo_original>
